<compile_context>
chip_gen: v6e
topology: v6e:2x2x1
jax: 0.10.0
libtpu: 0.0.40
codegen_flags: <defaults>
</compile_context>

<pallas_src>
import functools

import jax
import jax.numpy as jnp
from jax.experimental import pallas as pl
from jax.experimental.pallas import tpu as pltpu


# --------------------------------------------------------------------------- #
# Kernel
# --------------------------------------------------------------------------- #
def embedding_block_kernel(x_ref, w1_ref, b1_ref, w2_ref, b2_ref, o_ref,
                           xbuf, ybuf, *, H):
    """Fused (conv3x3 + BN) x2 over a slab of B stacked images.

    x_ref : (B*H, W*Cin)          bf16 wide input rows (W and channels on lanes)
    w1_ref: (3*W*Cin,  W*Cout)    bf16 stacked band matrices (BN1 scale folded)
    b1_ref: (1, W*Cout)           f32 folded bias (conv1 bias + BN1 shift)
    w2_ref: (3*W*Cout, W*Cout)    bf16 stacked band matrices (BN2 scale folded)
    b2_ref: (1, W*Cout)           f32 folded bias (conv2 bias + BN2 shift)
    o_ref : (B*H, W*Cout)         f32 lane-dense output
    xbuf  : VMEM (B*H+2, W*Cin)   f32 row-shift staging for layer 1
    ybuf  : VMEM (B*H+2, W*Cout)  f32 layer-1 activation (never leaves VMEM)
    """
    BH, wcin = x_ref.shape
    wcout = o_ref.shape[1]

    # Seam masks: zero the +-1-row neighbour wherever it crosses an image
    # boundary inside the stacked B*H rows (h == 0 / h == H-1).  These also
    # cover the first/last row of the whole block, so the two scratch halo
    # rows are never consumed and need no initialization at all.
    h1 = jax.lax.broadcasted_iota(jnp.int32, (BH, wcin), 0) % H
    h2 = jax.lax.broadcasted_iota(jnp.int32, (BH, wcout), 0) % H

    # -------------------- layer 1: conv3x3 + BN1 (folded) -------------------- #
    x_mid = x_ref[...]                                     # (BH, W*Cin) bf16
    xbuf[1:BH + 1, :] = x_mid.astype(jnp.float32)          # row-shift staging
    x_up = jnp.where(h1 != 0, xbuf[0:BH, :], 0.0).astype(x_mid.dtype)        # row h-1
    x_dn = jnp.where(h1 != H - 1, xbuf[2:BH + 2, :], 0.0).astype(x_mid.dtype)  # row h+1
    a1 = jnp.concatenate([x_up, x_mid, x_dn], axis=1)      # (BH, 3*W*Cin) bf16
    y1 = jnp.dot(a1, w1_ref[...],
                 preferred_element_type=jnp.float32) + b1_ref[...]

    # -------------------- layer 2: conv3x3 + BN2 (folded) -------------------- #
    ybuf[1:BH + 1, :] = y1                                 # stays in VMEM (fused)
    y_mid = y1.astype(jnp.bfloat16)
    y_up = jnp.where(h2 != 0, ybuf[0:BH, :], 0.0).astype(jnp.bfloat16)
    y_dn = jnp.where(h2 != H - 1, ybuf[2:BH + 2, :], 0.0).astype(jnp.bfloat16)
    a2 = jnp.concatenate([y_up, y_mid, y_dn], axis=1)      # (BH, 3*W*Cout) bf16
    y2 = jnp.dot(a2, w2_ref[...],
                 preferred_element_type=jnp.float32) + b2_ref[...]

    # lane-dense (full 128-lane, unmasked) output store
    o_ref[...] = y2.astype(o_ref.dtype)


def embedding_block_pallas(x_flat, w1s, b1, w2s, b2, *, images_per_step, H):
    """x_flat: (N*H, W*Cin_p) bf16; returns (N*H, W*Cout) f32."""
    NH, wcin = x_flat.shape
    wcout = w2s.shape[1]
    BH = images_per_step * H
    assert NH % BH == 0
    grid = NH // BH
    assert BH % 8 == 0 or grid == 1, "row block must be 8-sublane aligned"

    kernel = functools.partial(embedding_block_kernel, H=H)
    return pl.pallas_call(
        kernel,
        out_shape=jax.ShapeDtypeStruct((NH, wcout), jnp.float32),
        grid_spec=pltpu.PrefetchScalarGridSpec(
            num_scalar_prefetch=0,
            grid=(grid,),
            in_specs=[
                pl.BlockSpec((BH, wcin), lambda g: (g, 0)),
                # Weights/bias: constant block index -> resident across the grid.
                # TODO(synk): at scaled-up sizes, single-buffer these with
                # pipeline_mode=pl.Buffered(1) and move to H-tiled im2col.
                pl.BlockSpec((3 * wcin, wcout), lambda g: (0, 0)),
                pl.BlockSpec((1, wcout), lambda g: (0, 0)),
                pl.BlockSpec((3 * wcout, wcout), lambda g: (0, 0)),
                pl.BlockSpec((1, wcout), lambda g: (0, 0)),
            ],
            out_specs=pl.BlockSpec((BH, wcout), lambda g: (g, 0)),
            scratch_shapes=[
                pltpu.VMEM((BH + 2, wcin), jnp.float32),
                pltpu.VMEM((BH + 2, wcout), jnp.float32),
            ],
        ),
        compiler_params=pltpu.CompilerParams(
            dimension_semantics=("parallel",)),
    )(x_flat, w1s, b1, w2s, b2)


def pick_images_per_step(n, h, target_rows=256):
    """Fold images into the matmul M dim (target ~256 MXU rows), but keep at
    least 2 grid steps when N > 1 so both v7x TensorCores get a 'parallel'
    step."""
    cap = max(1, min(n, target_rows // h if h <= target_rows else 1))
    if n > 1:
        cap = min(cap, max(1, -(-n // 2)))
    for b in range(cap, 0, -1):
        if n % b == 0:
            return b
    return 1


# --------------------------------------------------------------------------- #
# One-time weight preparation (wrapper side, pure JAX)
# --------------------------------------------------------------------------- #
def band_matrices(w_hwio, W):
    """(3,3,Cin,Cout) HWIO kernel -> (3, W*Cin, W*Cout) per-kh band matrices.

    M_kh[w_src*Cin + ci, w_out*Cout + co] = w[kh, w_src - w_out + 1, ci, co]
    when |w_src - w_out| <= 1, else 0 (implements the W-direction 'same' pad).
    """
    kh_, kw_, cin, cout = w_hwio.shape
    assert kh_ == 3 and kw_ == 3
    w_src = jnp.arange(W)[:, None]
    w_out = jnp.arange(W)[None, :]
    kw = w_src - w_out + 1                                  # (W, W)
    valid = (kw >= 0) & (kw <= 2)
    blocks = w_hwio[:, jnp.clip(kw, 0, 2)]                  # (3, W, W, Cin, Cout)
    blocks = blocks * valid[None, :, :, None, None]
    return jnp.transpose(blocks, (0, 1, 3, 2, 4)).reshape(3, W * cin, W * cout)


def prepare_kernel_params(p, W, cin_pad_to=None, eps=1e-5):
    """Fold eval-mode BN (+ conv bias), zero-pad Cin, build STACKED band mats
    (kh concatenated along K, matching the kernel's [up|mid|dn] lane order),
    and cast the MXU operands to bf16."""
    s1 = p["gamma1"] / jnp.sqrt(p["var1"] + eps)
    c1 = p["beta1"] + (p["b1"] - p["mean1"]) * s1
    s2 = p["gamma2"] / jnp.sqrt(p["var2"] + eps)
    c2 = p["beta2"] + (p["b2"] - p["mean2"]) * s2

    w1 = p["w1_hwio"] * s1[None, None, None, :]
    if cin_pad_to is not None and cin_pad_to > w1.shape[2]:
        w1 = jnp.pad(w1, ((0, 0), (0, 0), (0, cin_pad_to - w1.shape[2]), (0, 0)))
    w2 = p["w2_hwio"] * s2[None, None, None, :]

    cin_p, cout = w1.shape[2], w1.shape[3]
    w1s = band_matrices(w1, W).reshape(3 * W * cin_p, W * cout).astype(jnp.bfloat16)
    w2s = band_matrices(w2, W).reshape(3 * W * cout, W * cout).astype(jnp.bfloat16)
    return {
        "w1": w1s,
        "b1": jnp.tile(c1, W).reshape(1, W * cout).astype(jnp.float32),
        "w2": w2s,
        "b2": jnp.tile(c2, W).reshape(1, W * cout).astype(jnp.float32),
    }


def init_params(key, in_channels, out_channels):
    """Deterministic synthetic parameters matching the PyTorch module's shapes."""
    ks = jax.random.split(key, 8)
    p = {}
    w1 = 0.1 * jax.random.normal(ks[0], (out_channels, in_channels, 3, 3), jnp.float32)
    w2 = 0.1 * jax.random.normal(ks[1], (out_channels, out_channels, 3, 3), jnp.float32)
    p["w1_hwio"] = jnp.transpose(w1, (2, 3, 1, 0))
    p["w2_hwio"] = jnp.transpose(w2, (2, 3, 1, 0))
    p["b1"] = 0.05 * jax.random.normal(ks[2], (out_channels,), jnp.float32)
    p["b2"] = 0.05 * jax.random.normal(ks[3], (out_channels,), jnp.float32)
    p["gamma1"] = 1.0 + 0.1 * jax.random.normal(ks[4], (out_channels,), jnp.float32)
    p["beta1"] = 0.1 * jax.random.normal(ks[5], (out_channels,), jnp.float32)
    p["mean1"] = 0.02 * jnp.arange(out_channels, dtype=jnp.float32)
    p["var1"] = 1.0 + 0.01 * jnp.arange(out_channels, dtype=jnp.float32)
    p["gamma2"] = 1.0 + 0.1 * jax.random.normal(ks[6], (out_channels,), jnp.float32)
    p["beta2"] = 0.1 * jax.random.normal(ks[7], (out_channels,), jnp.float32)
    p["mean2"] = -0.02 * jnp.arange(out_channels, dtype=jnp.float32)
    p["var2"] = 1.0 + 0.02 * jnp.arange(out_channels, dtype=jnp.float32)
    return p


# --------------------------------------------------------------------------- #
# Forward wrappers + pure-JAX reference
# --------------------------------------------------------------------------- #
def embedding_block_forward_nhwc(x_nhwc, kparams):
    """NHWC entry point (no transposes) — what a real NHWC model should call."""
    N, H, W, Cin = x_nhwc.shape
    wcin = kparams["w1"].shape[0] // 3
    cin_p = wcin // W
    wcout = kparams["w2"].shape[1]
    cout = wcout // W
    if cin_p > Cin:  # zero-pad channels so W*Cin_p is a full 128-lane multiple
        x_nhwc = jnp.pad(x_nhwc, ((0, 0), (0, 0), (0, 0), (0, cin_p - Cin)))
    x_flat = x_nhwc.reshape(N * H, W * cin_p).astype(jnp.bfloat16)
    y_flat = embedding_block_pallas(
        x_flat, kparams["w1"], kparams["b1"], kparams["w2"], kparams["b2"],
        images_per_step=pick_images_per_step(N, H), H=H)
    return y_flat.reshape(N, H, W, cout)


@jax.jit
def embedding_block_forward(x_nchw, kparams):
    """NCHW adapter that mirrors the PyTorch module interface.  In an NHWC
    pipeline, call embedding_block_forward_nhwc directly and drop both
    transposes (they cost as much HBM traffic as the kernel itself)."""
    y_nhwc = embedding_block_forward_nhwc(
        jnp.transpose(x_nchw, (0, 2, 3, 1)), kparams)
    return jnp.transpose(y_nhwc, (0, 3, 1, 2))


def reference_forward(x_nchw, params):
    """Pure-JAX reference (lax conv + eval-mode BN) for correctness checking."""
    x = jnp.transpose(x_nchw, (0, 2, 3, 1))

    def conv_bn(x, w, b, g, beta, m, v, eps=1e-5):
        y = jax.lax.conv_general_dilated(
            x, w, window_strides=(1, 1), padding="SAME",
            dimension_numbers=("NHWC", "HWIO", "NHWC")) + b
        return (y - m) / jnp.sqrt(v + eps) * g + beta

    y = conv_bn(x, params["w1_hwio"], params["b1"], params["gamma1"],
                params["beta1"], params["mean1"], params["var1"])
    y = conv_bn(y, params["w2_hwio"], params["b2"], params["gamma2"],
                params["beta2"], params["mean2"], params["var2"])
    return jnp.transpose(y, (0, 3, 1, 2))


if __name__ == "__main__":
    # N=8 exercises the batch-folding path: 2 "parallel" grid steps x 4 images,
    # i.e. M = 64 MXU rows per step and both v7x TensorCores busy.
    N, Cin, Cout, H, W = 8, 4, 8, 16, 16
    CIN_PAD = 8                                  # 4 -> 8 so W*Cin = 128 lanes
    key = jax.random.PRNGKey(0)
    kx, kp = jax.random.split(key)
    x = jax.random.normal(kx, (N, Cin, H, W), jnp.float32)   # NCHW like PyTorch
    params = init_params(kp, Cin, Cout)
    kparams = prepare_kernel_params(params, W, cin_pad_to=CIN_PAD)

    out = jax.block_until_ready(embedding_block_forward(x, kparams))
    ref = reference_forward(x, params)
    assert out.shape == (N, Cout, H, W), out.shape
    max_err = float(jnp.max(jnp.abs(out - ref)))
    # bf16 MXU operands with f32 accumulation: tolerance loosened accordingly.
    assert max_err < 6e-2, max_err

    print("KERNEL_OK")
</pallas_src>

<mosaic_0001>
module attributes {stable_mosaic.version = 11 : i64} {
  func.func @embedding_block_kernel(%arg0: i32, %arg1: memref<64x128xbf16, #tpu.memory_space<vmem>>, %arg2: memref<384x128xbf16, #tpu.memory_space<vmem>>, %arg3: memref<1x128xf32, #tpu.memory_space<vmem>>, %arg4: memref<384x128xbf16, #tpu.memory_space<vmem>>, %arg5: memref<1x128xf32, #tpu.memory_space<vmem>>, %arg6: memref<64x128xf32, #tpu.memory_space<vmem>>, %arg7: memref<66x128xf32, #tpu.memory_space<vmem>>, %arg8: memref<66x128xf32, #tpu.memory_space<vmem>>) attributes {dimension_semantics = [#tpu.dimension_semantics<parallel>], iteration_bounds = array<i64: 2>, scalar_prefetch = 0 : i64, scratch_operands = 2 : i64, tpu.core_type = #tpu.core_type<tc>, window_params = [{transform_indices = @transform_0, window_bounds = array<i64: 64, 128>}, {pipeline_mode = #tpu.pipeline_mode<synchronous>, transform_indices = @transform_1, window_bounds = array<i64: 384, 128>}, {pipeline_mode = #tpu.pipeline_mode<synchronous>, transform_indices = @transform_2, window_bounds = array<i64: 1, 128>}, {pipeline_mode = #tpu.pipeline_mode<synchronous>, transform_indices = @transform_3, window_bounds = array<i64: 384, 128>}, {pipeline_mode = #tpu.pipeline_mode<synchronous>, transform_indices = @transform_4, window_bounds = array<i64: 1, 128>}, {transform_indices = @transform_5, window_bounds = array<i64: 64, 128>}]} {
    %0 = tpu.iota {dimensions = array<i32: 0>} : vector<64x128xi32>
    %c16_i32 = arith.constant 16 : i32
    %c0_i32 = arith.constant 0 : i32
    %1 = arith.cmpi eq, %c16_i32, %c0_i32 : i32
    %c1_i32 = arith.constant 1 : i32
    %2 = arith.select %1, %c1_i32, %c16_i32 : i32
    %3 = vector.broadcast %2 : i32 to vector<64x128xi32>
    %4 = arith.remsi %0, %3 : vector<64x128xi32>
    %c0_i32_0 = arith.constant 0 : i32
    %5 = vector.broadcast %c0_i32_0 : i32 to vector<64x128xi32>
    %6 = arith.cmpi ne, %4, %5 : vector<64x128xi32>
    %c0_i32_1 = arith.constant 0 : i32
    %7 = vector.broadcast %c0_i32_1 : i32 to vector<64x128xi32>
    %8 = arith.cmpi slt, %4, %7 : vector<64x128xi32>
    %c0_i32_2 = arith.constant 0 : i32
    %9 = arith.cmpi slt, %2, %c0_i32_2 : i32
    %10 = vector.broadcast %9 : i1 to vector<64x128xi1>
    %11 = vector.broadcast %10 : vector<64x128xi1> to vector<64x128xi1>
    %12 = arith.xori %8, %11 : vector<64x128xi1>
    %13 = arith.andi %12, %6 : vector<64x128xi1>
    %14 = vector.broadcast %2 : i32 to vector<64x128xi32>
    %15 = arith.addi %4, %14 : vector<64x128xi32>
    %16 = arith.select %13, %15, %4 : vector<64x128xi1>, vector<64x128xi32>
    %17 = tpu.iota {dimensions = array<i32: 0>} : vector<64x128xi32>
    %c16_i32_3 = arith.constant 16 : i32
    %c0_i32_4 = arith.constant 0 : i32
    %18 = arith.cmpi eq, %c16_i32_3, %c0_i32_4 : i32
    %c1_i32_5 = arith.constant 1 : i32
    %19 = arith.select %18, %c1_i32_5, %c16_i32_3 : i32
    %20 = vector.broadcast %19 : i32 to vector<64x128xi32>
    %21 = arith.remsi %17, %20 : vector<64x128xi32>
    %c0_i32_6 = arith.constant 0 : i32
    %22 = vector.broadcast %c0_i32_6 : i32 to vector<64x128xi32>
    %23 = arith.cmpi ne, %21, %22 : vector<64x128xi32>
    %c0_i32_7 = arith.constant 0 : i32
    %24 = vector.broadcast %c0_i32_7 : i32 to vector<64x128xi32>
    %25 = arith.cmpi slt, %21, %24 : vector<64x128xi32>
    %c0_i32_8 = arith.constant 0 : i32
    %26 = arith.cmpi slt, %19, %c0_i32_8 : i32
    %27 = vector.broadcast %26 : i1 to vector<64x128xi1>
    %28 = vector.broadcast %27 : vector<64x128xi1> to vector<64x128xi1>
    %29 = arith.xori %25, %28 : vector<64x128xi1>
    %30 = arith.andi %29, %23 : vector<64x128xi1>
    %31 = vector.broadcast %19 : i32 to vector<64x128xi32>
    %32 = arith.addi %21, %31 : vector<64x128xi32>
    %33 = arith.select %30, %32, %21 : vector<64x128xi1>, vector<64x128xi32>
    %c0 = arith.constant 0 : index
    %c0_9 = arith.constant 0 : index
    %34 = vector.load %arg1[%c0, %c0_9] : memref<64x128xbf16, #tpu.memory_space<vmem>>, vector<64x128xbf16>
    %35 = arith.extf %34 : vector<64x128xbf16> to vector<64x128xf32>
    %c1 = arith.constant 1 : index
    %c0_10 = arith.constant 0 : index
    %36 = vector.load %arg7[%c1, %c0_10] : memref<66x128xf32, #tpu.memory_space<vmem>>, vector<64x128xf32>
    tpu.vector_store %arg7[%c1, %c0_10], %35 {strides = array<i32>} : memref<66x128xf32, #tpu.memory_space<vmem>>, vector<64x128xf32>,
    %c0_i32_11 = arith.constant 0 : i32
    %37 = vector.broadcast %c0_i32_11 : i32 to vector<64x128xi32>
    %38 = arith.cmpi ne, %16, %37 : vector<64x128xi32>
    %c0_12 = arith.constant 0 : index
    %c0_13 = arith.constant 0 : index
    %39 = vector.load %arg7[%c0_12, %c0_13] : memref<66x128xf32, #tpu.memory_space<vmem>>, vector<64x128xf32>
    %cst = arith.constant 0.000000e+00 : f32
    %40 = vector.broadcast %cst : f32 to vector<64x128xf32>
    %41 = arith.select %38, %39, %40 : vector<64x128xi1>, vector<64x128xf32>
    %42 = arith.truncf %41 : vector<64x128xf32> to vector<64x128xbf16>
    %c15_i32 = arith.constant 15 : i32
    %43 = vector.broadcast %c15_i32 : i32 to vector<64x128xi32>
    %44 = arith.cmpi ne, %16, %43 : vector<64x128xi32>
    %c2 = arith.constant 2 : index
    %c0_14 = arith.constant 0 : index
    %45 = vector.load %arg7[%c2, %c0_14] : memref<66x128xf32, #tpu.memory_space<vmem>>, vector<64x128xf32>
    %cst_15 = arith.constant 0.000000e+00 : f32
    %46 = vector.broadcast %cst_15 : f32 to vector<64x128xf32>
    %47 = arith.select %44, %45, %46 : vector<64x128xi1>, vector<64x128xf32>
    %48 = arith.truncf %47 : vector<64x128xf32> to vector<64x128xbf16>
    %49 = tpu.concatenate %42, %34, %48 in 1 : vector<64x128xbf16>, vector<64x128xbf16>, vector<64x128xbf16> -> vector<64x384xbf16>
    %c0_16 = arith.constant 0 : index
    %c0_17 = arith.constant 0 : index
    %50 = vector.load %arg2[%c0_16, %c0_17] : memref<384x128xbf16, #tpu.memory_space<vmem>>, vector<384x128xbf16>
    %cst_18 = arith.constant dense<0.000000e+00> : vector<64x128xf32>
    %51 = tpu.matmul %49, %50, %cst_18 {dimension_numbers = #tpu.dot_dimension_numbers<[1], [0], [0], [1], [0, 0, 1, 1], [], []>} : vector<64x384xbf16>, vector<384x128xbf16>, vector<64x128xf32> -> vector<64x128xf32>
    %c0_19 = arith.constant 0 : index
    %c0_20 = arith.constant 0 : index
    %52 = vector.load %arg3[%c0_19, %c0_20] : memref<1x128xf32, #tpu.memory_space<vmem>>, vector<1x128xf32>
    %53 = vector.broadcast %52 : vector<1x128xf32> to vector<64x128xf32>
    %54 = arith.addf %51, %53 : vector<64x128xf32>
    %c1_21 = arith.constant 1 : index
    %c0_22 = arith.constant 0 : index
    %55 = vector.load %arg8[%c1_21, %c0_22] : memref<66x128xf32, #tpu.memory_space<vmem>>, vector<64x128xf32>
    tpu.vector_store %arg8[%c1_21, %c0_22], %54 {strides = array<i32>} : memref<66x128xf32, #tpu.memory_space<vmem>>, vector<64x128xf32>,
    %56 = arith.truncf %54 : vector<64x128xf32> to vector<64x128xbf16>
    %c0_i32_23 = arith.constant 0 : i32
    %57 = vector.broadcast %c0_i32_23 : i32 to vector<64x128xi32>
    %58 = arith.cmpi ne, %33, %57 : vector<64x128xi32>
    %c0_24 = arith.constant 0 : index
    %c0_25 = arith.constant 0 : index
    %59 = vector.load %arg8[%c0_24, %c0_25] : memref<66x128xf32, #tpu.memory_space<vmem>>, vector<64x128xf32>
    %cst_26 = arith.constant 0.000000e+00 : f32
    %60 = vector.broadcast %cst_26 : f32 to vector<64x128xf32>
    %61 = arith.select %58, %59, %60 : vector<64x128xi1>, vector<64x128xf32>
    %62 = arith.truncf %61 : vector<64x128xf32> to vector<64x128xbf16>
    %c15_i32_27 = arith.constant 15 : i32
    %63 = vector.broadcast %c15_i32_27 : i32 to vector<64x128xi32>
    %64 = arith.cmpi ne, %33, %63 : vector<64x128xi32>
    %c2_28 = arith.constant 2 : index
    %c0_29 = arith.constant 0 : index
    %65 = vector.load %arg8[%c2_28, %c0_29] : memref<66x128xf32, #tpu.memory_space<vmem>>, vector<64x128xf32>
    %cst_30 = arith.constant 0.000000e+00 : f32
    %66 = vector.broadcast %cst_30 : f32 to vector<64x128xf32>
    %67 = arith.select %64, %65, %66 : vector<64x128xi1>, vector<64x128xf32>
    %68 = arith.truncf %67 : vector<64x128xf32> to vector<64x128xbf16>
    %69 = tpu.concatenate %62, %56, %68 in 1 : vector<64x128xbf16>, vector<64x128xbf16>, vector<64x128xbf16> -> vector<64x384xbf16>
    %c0_31 = arith.constant 0 : index
    %c0_32 = arith.constant 0 : index
    %70 = vector.load %arg4[%c0_31, %c0_32] : memref<384x128xbf16, #tpu.memory_space<vmem>>, vector<384x128xbf16>
    %cst_33 = arith.constant dense<0.000000e+00> : vector<64x128xf32>
    %71 = tpu.matmul %69, %70, %cst_33 {dimension_numbers = #tpu.dot_dimension_numbers<[1], [0], [0], [1], [0, 0, 1, 1], [], []>} : vector<64x384xbf16>, vector<384x128xbf16>, vector<64x128xf32> -> vector<64x128xf32>
    %c0_34 = arith.constant 0 : index
    %c0_35 = arith.constant 0 : index
    %72 = vector.load %arg5[%c0_34, %c0_35] : memref<1x128xf32, #tpu.memory_space<vmem>>, vector<1x128xf32>
    %73 = vector.broadcast %72 : vector<1x128xf32> to vector<64x128xf32>
    %74 = arith.addf %71, %73 : vector<64x128xf32>
    %c0_36 = arith.constant 0 : index
    %c0_37 = arith.constant 0 : index
    %75 = vector.load %arg6[%c0_36, %c0_37] : memref<64x128xf32, #tpu.memory_space<vmem>>, vector<64x128xf32>
    tpu.vector_store %arg6[%c0_36, %c0_37], %74 {strides = array<i32>} : memref<64x128xf32, #tpu.memory_space<vmem>>, vector<64x128xf32>,
    return
  }
  func.func @transform_0(%arg0: i32) -> (i32, i32) {
    %c0_i32 = arith.constant 0 : i32
    %c0_i32_0 = arith.constant 0 : i32
    return %arg0, %c0_i32 : i32, i32
  }
  func.func @transform_1(%arg0: i32) -> (i32, i32) {
    %c0_i32 = arith.constant 0 : i32
    %c0_i32_0 = arith.constant 0 : i32
    %c0_i32_1 = arith.constant 0 : i32
    return %c0_i32, %c0_i32_0 : i32, i32
  }
  func.func @transform_2(%arg0: i32) -> (i32, i32) {
    %c0_i32 = arith.constant 0 : i32
    %c0_i32_0 = arith.constant 0 : i32
    %c0_i32_1 = arith.constant 0 : i32
    return %c0_i32, %c0_i32_0 : i32, i32
  }
  func.func @transform_3(%arg0: i32) -> (i32, i32) {
    %c0_i32 = arith.constant 0 : i32
    %c0_i32_0 = arith.constant 0 : i32
    %c0_i32_1 = arith.constant 0 : i32
    return %c0_i32, %c0_i32_0 : i32, i32
  }
  func.func @transform_4(%arg0: i32) -> (i32, i32) {
    %c0_i32 = arith.constant 0 : i32
    %c0_i32_0 = arith.constant 0 : i32
    %c0_i32_1 = arith.constant 0 : i32
    return %c0_i32, %c0_i32_0 : i32, i32
  }
  func.func @transform_5(%arg0: i32) -> (i32, i32) {
    %c0_i32 = arith.constant 0 : i32
    %c0_i32_0 = arith.constant 0 : i32
    return %arg0, %c0_i32 : i32, i32
  }
}

</mosaic_0001>

<llo_original>
// kernel: embedding_block_forward.1
$region0: #{embedding_block_forward.1}
  #allocation0 [shape = 'u32[]', space=smem, size = 0x4, offset = 0x4, fixed_abs, tag = 'smem constant byte address 0x4 - core index']
  #allocation1 [shape = 'u32[144,128]{1,0:T(1,128)}', space=vmem, size = 0x12000, scoped, tag = 'internal scratch']
  #allocation2 [shape = 'f32[66,128]{1,0:T(8,128)}', space=vmem, size = 0x9000, scoped, tag = 'scratch operand']
  #allocation3 [shape = 'f32[66,128]{1,0:T(8,128)}', space=vmem, size = 0x9000, scoped, tag = 'scratch operand']
  %s0 = inlined_call_operand.vmem [shape: bf16[128,128], index: 0, kind: input, shape index: {}]
  %s1 = inlined_call_operand.vmem [shape: bf16[384,128], index: 1, kind: input, shape index: {}]
  %s2 = inlined_call_operand.vmem [shape: f32[1,128], index: 2, kind: input, shape index: {}]
  %s3 = inlined_call_operand.vmem [shape: bf16[384,128], index: 3, kind: input, shape index: {}]
  %s4 = inlined_call_operand.vmem [shape: f32[1,128], index: 4, kind: input, shape index: {}]
  %s5 = inlined_call_operand.vmem [shape: f32[128,128], index: 5, kind: output, shape index: {}]
  %s6 = sld [smem:[#allocation0]]
  $region53: #{embedding_block_forward.1} parent=0
    _
  %s8 = ssub.s32 1, %s6
  %s9 = scalar_select 0, %s8, %s6
  loop: start=0, step=1, limit=4
  $region2: #{embedding_block_forward.1} parent=0 // loop_pre_header
    _
  $region3: #{embedding_block_forward.1} parent=0 // loop_header
    %s11 = sphi 0, %s15
    %p12 = scmp.ge.s32.totalorder %s11, 4
    %s21 = sphi 0, %s23
    %s24 = sphi 0, %s21
    %s25 = sphi 0, %s24
    %s41 = sphi 0, %s25
    %s45 = sphi 0, %s45
    %s47 = sphi 0, %s45
    %s48 = sphi 0, %s47
    %s62 = sphi 0, %s48
    %s66 = sphi 0, %s66
    %s68 = sphi 0, %s66
    %s69 = sphi 0, %s68
    %s83 = sphi 0, %s69
    %s87 = sphi 0, %s87
    %s89 = sphi 0, %s87
    %s90 = sphi 0, %s89
    %s104 = sphi 0, %s90
    %s108 = sphi 0, %s108
    %s110 = sphi 0, %s108
    %s111 = sphi 0, %s110
    %s125 = sphi 0, %s111
    %s131 = sphi 0, %s133
    %s134 = sphi 0, %s131
    %s135 = sphi 0, %s134
    %s151 = sphi 0, %s135
  $region4: #{embedding_block_forward.1} parent=0 // loop_header_branch
    %14 = sbr.rel (%p12) target = $region8
  $region5: #{embedding_block_forward.1} parent=0 // loop_body
    %s16 = ssub.s32 %s11, 1
    %s17 = ssub.s32 %s11, 2
    %s18 = sadd.s32 %s11, 1
    %s19 = ssub.s32 %s11, %s18
    %p20 = scmp.eq.s32.totalorder %s19, 0
    %s22 = sadd.s32 %s21, 1
    %s23 = scalar_select %p20, %s21, %s22
    %p26 = pneg %p20
    %p27 = scmp.eq.s32.totalorder %s11, 1
    %p28 = por %p26, %p27
    %p29 = scmp.ne.s32.totalorder %s21, %s24
    %p30 = scmp.eq.s32.totalorder %s11, 0
    %p31 = por %p29, %p30
    %p32 = scmp.ne.s32.totalorder %s21, %s24
    %p33 = scmp.eq.s32.totalorder %s16, 1
    %p34 = por %p32, %p33
    %p35 = scmp.ne.s32.totalorder %s24, %s25
    %p36 = scmp.eq.s32.totalorder %s16, 0
    %p37 = por %p35, %p36
    %p38 = scmp.ne.s32.totalorder %s24, %s25
    %p39 = scmp.eq.s32.totalorder %s17, 1
    %p40 = por %p38, %p39
    %p42 = scmp.ne.s32.totalorder %s25, %s41
    %p43 = scmp.eq.s32.totalorder %s17, 0
    %p44 = por %p42, %p43
    %s46 = sadd.s32 %s45, 1
    %p49 = scmp.eq.s32.totalorder %s11, 1
    %p50 = scmp.ne.s32.totalorder %s45, %s47
    %p51 = scmp.eq.s32.totalorder %s11, 0
    %p52 = por %p50, %p51
    %p53 = scmp.ne.s32.totalorder %s45, %s47
    %p54 = scmp.eq.s32.totalorder %s16, 1
    %p55 = por %p53, %p54
    %p56 = scmp.ne.s32.totalorder %s47, %s48
    %p57 = scmp.eq.s32.totalorder %s16, 0
    %p58 = por %p56, %p57
    %p59 = scmp.ne.s32.totalorder %s47, %s48
    %p60 = scmp.eq.s32.totalorder %s17, 1
    %p61 = por %p59, %p60
    %p63 = scmp.ne.s32.totalorder %s48, %s62
    %p64 = scmp.eq.s32.totalorder %s17, 0
    %p65 = por %p63, %p64
    %s67 = sadd.s32 %s66, 1
    %p70 = scmp.eq.s32.totalorder %s11, 1
    %p71 = scmp.ne.s32.totalorder %s66, %s68
    %p72 = scmp.eq.s32.totalorder %s11, 0
    %p73 = por %p71, %p72
    %p74 = scmp.ne.s32.totalorder %s66, %s68
    %p75 = scmp.eq.s32.totalorder %s16, 1
    %p76 = por %p74, %p75
    %p77 = scmp.ne.s32.totalorder %s68, %s69
    %p78 = scmp.eq.s32.totalorder %s16, 0
    %p79 = por %p77, %p78
    %p80 = scmp.ne.s32.totalorder %s68, %s69
    %p81 = scmp.eq.s32.totalorder %s17, 1
    %p82 = por %p80, %p81
    %p84 = scmp.ne.s32.totalorder %s69, %s83
    %p85 = scmp.eq.s32.totalorder %s17, 0
    %p86 = por %p84, %p85
    %s88 = sadd.s32 %s87, 1
    %p91 = scmp.eq.s32.totalorder %s11, 1
    %p92 = scmp.ne.s32.totalorder %s87, %s89
    %p93 = scmp.eq.s32.totalorder %s11, 0
    %p94 = por %p92, %p93
    %p95 = scmp.ne.s32.totalorder %s87, %s89
    %p96 = scmp.eq.s32.totalorder %s16, 1
    %p97 = por %p95, %p96
    %p98 = scmp.ne.s32.totalorder %s89, %s90
    %p99 = scmp.eq.s32.totalorder %s16, 0
    %p100 = por %p98, %p99
    %p101 = scmp.ne.s32.totalorder %s89, %s90
    %p102 = scmp.eq.s32.totalorder %s17, 1
    %p103 = por %p101, %p102
    %p105 = scmp.ne.s32.totalorder %s90, %s104
    %p106 = scmp.eq.s32.totalorder %s17, 0
    %p107 = por %p105, %p106
    %s109 = sadd.s32 %s108, 1
    %p112 = scmp.eq.s32.totalorder %s11, 1
    %p113 = scmp.ne.s32.totalorder %s108, %s110
    %p114 = scmp.eq.s32.totalorder %s11, 0
    %p115 = por %p113, %p114
    %p116 = scmp.ne.s32.totalorder %s108, %s110
    %p117 = scmp.eq.s32.totalorder %s16, 1
    %p118 = por %p116, %p117
    %p119 = scmp.ne.s32.totalorder %s110, %s111
    %p120 = scmp.eq.s32.totalorder %s16, 0
    %p121 = por %p119, %p120
    %p122 = scmp.ne.s32.totalorder %s110, %s111
    %p123 = scmp.eq.s32.totalorder %s17, 1
    %p124 = por %p122, %p123
    %p126 = scmp.ne.s32.totalorder %s111, %s125
    %p127 = scmp.eq.s32.totalorder %s17, 0
    %p128 = por %p126, %p127
    %s129 = ssub.s32 %s11, %s18
    %p130 = scmp.eq.s32.totalorder %s129, 0
    %s132 = sadd.s32 %s131, 1
    %s133 = scalar_select %p130, %s131, %s132
    %p136 = pneg %p130
    %p137 = scmp.eq.s32.totalorder %s11, 1
    %p138 = por %p136, %p137
    %p139 = scmp.ne.s32.totalorder %s131, %s134
    %p140 = scmp.eq.s32.totalorder %s11, 0
    %p141 = por %p139, %p140
    %p142 = scmp.ne.s32.totalorder %s131, %s134
    %p143 = scmp.eq.s32.totalorder %s16, 1
    %p144 = por %p142, %p143
    %p145 = scmp.ne.s32.totalorder %s134, %s135
    %p146 = scmp.eq.s32.totalorder %s16, 0
    %p147 = por %p145, %p146
    %p148 = scmp.ne.s32.totalorder %s134, %s135
    %p149 = scmp.eq.s32.totalorder %s17, 1
    %p150 = por %p148, %p149
    %p152 = scmp.ne.s32.totalorder %s135, %s151
    %p153 = scmp.eq.s32.totalorder %s17, 0
    %p154 = por %p152, %p153
    %p155 = scmp.le.s32.totalorder 1, %s11
    %p156 = scmp.lt.s32.totalorder %s11, 3
    %p157 = pnand %p155, %p156
    %p158 = pneg %p157
    // Predicated region
    $region9: #{embedding_block_forward.1} parent=5 // pred_check
      _
    $region10: #{embedding_block_forward.1} parent=5 // pred_check_branch
      %160 = sbr.rel (%p157) target = $region12
    $region11: #{embedding_block_forward.1} parent=5 // pred_region
      %s161 = ssub.s32 %s11, 1
      // Predicated region
      $region13: #{embedding_block_forward.1} parent=11 // pred_check
        %p162 = pneg %p58
      $region14: #{embedding_block_forward.1} parent=11 // pred_check_branch
        %164 = sbr.rel (%p162) target = $region16
      $region15: #{embedding_block_forward.1} parent=11 // pred_region
        _
      $region16: #{embedding_block_forward.1} parent=11 // pred_fallthru
        _
      // Predicated region
      $region17: #{embedding_block_forward.1} parent=11 // pred_check
        %p165 = pneg %p79
      $region18: #{embedding_block_forward.1} parent=11 // pred_check_branch
        %167 = sbr.rel (%p165) target = $region20
      $region19: #{embedding_block_forward.1} parent=11 // pred_region
        _
      $region20: #{embedding_block_forward.1} parent=11 // pred_fallthru
        _
      // Predicated region
      $region21: #{embedding_block_forward.1} parent=11 // pred_check
        %p168 = pneg %p100
      $region22: #{embedding_block_forward.1} parent=11 // pred_check_branch
        %170 = sbr.rel (%p168) target = $region24
      $region23: #{embedding_block_forward.1} parent=11 // pred_region
        _
      $region24: #{embedding_block_forward.1} parent=11 // pred_fallthru
        _
      // Predicated region
      $region25: #{embedding_block_forward.1} parent=11 // pred_check
        %p171 = pneg %p121
      $region26: #{embedding_block_forward.1} parent=11 // pred_check_branch
        %173 = sbr.rel (%p171) target = $region28
      $region27: #{embedding_block_forward.1} parent=11 // pred_region
        _
      $region28: #{embedding_block_forward.1} parent=11 // pred_fallthru
        _
    $region12: #{embedding_block_forward.1} parent=5 // pred_fallthru
      _
    %p174 = scmp.lt.s32.totalorder %s11, 2
    // Predicated region
    $region29: #{embedding_block_forward.1} parent=5 // pred_check
      %p175 = pneg %p174
    $region30: #{embedding_block_forward.1} parent=5 // pred_check_branch
      %177 = sbr.rel (%p175) target = $region32
    $region31: #{embedding_block_forward.1} parent=5 // pred_region
      // Predicated region
      $region33: #{embedding_block_forward.1} parent=31 // pred_check
        %p178 = pneg %p31
      $region34: #{embedding_block_forward.1} parent=31 // pred_check_branch
        %180 = sbr.rel (%p178) target = $region36
      $region35: #{embedding_block_forward.1} parent=31 // pred_region
        %s181 = smul.u32 8, %s11
        %p182 = scmp.lt.s32.totalorder %s181, 15
        %s183 = scalar_select %p182, %s181, 15
        %s184 = smul.addr %s183, 4
        %s185 = scalar_lea.vmem %s0, %s184
        %s186 = smul.u32 8, %s11
      $region36: #{embedding_block_forward.1} parent=31 // pred_fallthru
        _
    $region32: #{embedding_block_forward.1} parent=5 // pred_fallthru
      _
    %p187 = scmp.le.s32.totalorder 1, %s11
    %p188 = scmp.lt.s32.totalorder %s11, 3
    %p189 = pnand %p187, %p188
    %p190 = pneg %p189
    // Predicated region
    $region37: #{embedding_block_forward.1} parent=5 // pred_check
      _
    $region38: #{embedding_block_forward.1} parent=5 // pred_check_branch
      %192 = sbr.rel (%p189) target = $region40
    $region39: #{embedding_block_forward.1} parent=5 // pred_region
      %s193 = ssub.s32 %s11, 1
      %s194 = smul.u32 8, %s16
      %p195 = scmp.lt.s32.totalorder %s194, 15
      %s196 = scalar_select %p195, %s194, 15
      %s197 = smul.addr %s196, 4
      %s198 = scalar_lea.vmem %s0, %s197
      %p199 = pneg %p37
      %p200 = pneg %p34
      %p201 = pneg %p58
      %p202 = pneg %p55
      %p203 = pneg %p79
      %p204 = pneg %p76
      %p205 = pneg %p100
      %p206 = pneg %p97
      %p207 = pneg %p121
      %p208 = pneg %p118
      %p209 = pneg %p147
      %p210 = pneg %p144
      %s211 = smul.u32 8, %s16
      %p212 = scmp.lt.s32.totalorder %s211, 15
      %s213 = scalar_select %p212, %s211, 15
      %s214 = smul.addr %s213, 8
      %s215 = scalar_lea.vmem %s5, %s214
      %s216 = smul.u32 8, %s16
      %p217 = scmp.lt.s32.totalorder %s216, 15
      %s218 = scalar_select %p217, %s216, 15
      %s219 = smul.addr %s218, 4
      %s220 = scalar_lea.vmem %s0, %s219
      %s221 = smul.u32 8, %s16
      %s222 = smul.u32 8, %s16
      %p223 = scmp.lt.s32.totalorder %s222, 15
      %s224 = scalar_select %p223, %s222, 15
      %s225 = smul.addr %s224, 8
      %s226 = scalar_lea.vmem %s5, %s225
      %s227 = smul.u32 8, %s16
      %v229 = vlaneseq
      %v230 = vshrl.u32 %v229, 7
      %v231 = vadd.s32 %v230, 8
      %v232 = vadd.s32 %v230, 16
      %v233 = vadd.s32 %v230, 24
      %v234 = vadd.s32 %v230, 32
      %v235 = vadd.s32 %v230, 40
      %v236 = vadd.s32 %v230, 48
      %v237 = vadd.s32 %v230, 56
      %vm238 = vcmp.lt.s32.totalorder %v230, 0
      %v239 = vsub.s32 0, %v230
      %v240 = vsel %vm238, %v239, %v230
      %v241 = vshrl.u32 %v240, 4
      %v242 = vand.u32 %v240, 15
      %v243 = vsub.s32 0, %v242
      %v244 = vsel %vm238, %v243, %v242
      %vm245 = vcmp.lt.s32.totalorder %v231, 0
      %v246 = vsub.s32 0, %v231
      %v247 = vsel %vm245, %v246, %v231
      %v248 = vshrl.u32 %v247, 4
      %v249 = vand.u32 %v247, 15
      %v250 = vsub.s32 0, %v249
      %v251 = vsel %vm245, %v250, %v249
      %vm252 = vcmp.lt.s32.totalorder %v232, 0
      %v253 = vsub.s32 0, %v232
      %v254 = vsel %vm252, %v253, %v232
      %v255 = vshrl.u32 %v254, 4
      %v256 = vand.u32 %v254, 15
      %v257 = vsub.s32 0, %v256
      %v258 = vsel %vm252, %v257, %v256
      %vm259 = vcmp.lt.s32.totalorder %v233, 0
      %v260 = vsub.s32 0, %v233
      %v261 = vsel %vm259, %v260, %v233
      %v262 = vshrl.u32 %v261, 4
      %v263 = vand.u32 %v261, 15
      %v264 = vsub.s32 0, %v263
      %v265 = vsel %vm259, %v264, %v263
      %vm266 = vcmp.lt.s32.totalorder %v234, 0
      %v267 = vsub.s32 0, %v234
      %v268 = vsel %vm266, %v267, %v234
      %v269 = vshrl.u32 %v268, 4
      %v270 = vand.u32 %v268, 15
      %v271 = vsub.s32 0, %v270
      %v272 = vsel %vm266, %v271, %v270
      %vm273 = vcmp.lt.s32.totalorder %v235, 0
      %v274 = vsub.s32 0, %v235
      %v275 = vsel %vm273, %v274, %v235
      %v276 = vshrl.u32 %v275, 4
      %v277 = vand.u32 %v275, 15
      %v278 = vsub.s32 0, %v277
      %v279 = vsel %vm273, %v278, %v277
      %vm280 = vcmp.lt.s32.totalorder %v236, 0
      %v281 = vsub.s32 0, %v236
      %v282 = vsel %vm280, %v281, %v236
      %v283 = vshrl.u32 %v282, 4
      %v284 = vand.u32 %v282, 15
      %v285 = vsub.s32 0, %v284
      %v286 = vsel %vm280, %v285, %v284
      %vm287 = vcmp.lt.s32.totalorder %v237, 0
      %v288 = vsub.s32 0, %v237
      %v289 = vsel %vm287, %v288, %v237
      %v290 = vshrl.u32 %v289, 4
      %v291 = vand.u32 %v289, 15
      %v292 = vsub.s32 0, %v291
      %v293 = vsel %vm287, %v292, %v291
      %vm294 = vcmp.ne.s32.totalorder %v244, 0
      %vm295 = vcmp.ne.s32.totalorder %v251, 0
      %vm296 = vcmp.ne.s32.totalorder %v258, 0
      %vm297 = vcmp.ne.s32.totalorder %v265, 0
      %vm298 = vcmp.ne.s32.totalorder %v272, 0
      %vm299 = vcmp.ne.s32.totalorder %v279, 0
      %vm300 = vcmp.ne.s32.totalorder %v286, 0
      %vm301 = vcmp.ne.s32.totalorder %v293, 0
      %vm302 = vcmp.lt.s32.totalorder %v244, 0
      %vm303 = vcmp.lt.s32.totalorder %v251, 0
      %vm304 = vcmp.lt.s32.totalorder %v258, 0
      %vm305 = vcmp.lt.s32.totalorder %v265, 0
      %vm306 = vcmp.lt.s32.totalorder %v272, 0
      %vm307 = vcmp.lt.s32.totalorder %v279, 0
      %vm308 = vcmp.lt.s32.totalorder %v286, 0
      %vm309 = vcmp.lt.s32.totalorder %v293, 0
      %vm310 = vmand %vm302, %vm294
      %vm311 = vmand %vm303, %vm295
      %vm312 = vmand %vm304, %vm296
      %vm313 = vmand %vm305, %vm297
      %vm314 = vmand %vm306, %vm298
      %vm315 = vmand %vm307, %vm299
      %vm316 = vmand %vm308, %vm300
      %vm317 = vmand %vm309, %vm301
      %v318 = vadd.s32 %v244, 16
      %v319 = vadd.s32 %v251, 16
      %v320 = vadd.s32 %v258, 16
      %v321 = vadd.s32 %v265, 16
      %v322 = vadd.s32 %v272, 16
      %v323 = vadd.s32 %v279, 16
      %v324 = vadd.s32 %v286, 16
      %v325 = vadd.s32 %v293, 16
      %v326 = vsel %vm310, %v318, %v244
      %v327 = vsel %vm311, %v319, %v251
      %v328 = vsel %vm312, %v320, %v258
      %v329 = vsel %vm313, %v321, %v265
      %v330 = vsel %vm314, %v322, %v272
      %v331 = vsel %vm315, %v323, %v279
      %v332 = vsel %vm316, %v324, %v286
      %v333 = vsel %vm317, %v325, %v293
      %v334 = vld [vmem:[%s220] sm:$0xf]
      %v335 = vld [vmem:[%s220 + $0x4] sm:$0xf]
      %v336 = vld [vmem:[%s220 + $0x8] sm:$0xf]
      %v337 = vld [vmem:[%s220 + $0xc] sm:$0xf]
      %v338 = vld [vmem:[%s220 + $0x10] sm:$0xf]
      %v339 = vld [vmem:[%s220 + $0x14] sm:$0xf]
      %v340 = vld [vmem:[%s220 + $0x18] sm:$0xf]
      %v341 = vld [vmem:[%s220 + $0x1c] sm:$0xf]
      %v342 = vunpack.c.l.bf16 %v334
      %v343 = vunpack.c.l.bf16 %v335
      %v344 = vunpack.c.l.bf16 %v336
      %v345 = vunpack.c.l.bf16 %v337
      %v346 = vunpack.c.l.bf16 %v338
      %v347 = vunpack.c.l.bf16 %v339
      %v348 = vunpack.c.l.bf16 %v340
      %v349 = vunpack.c.l.bf16 %v341
      %350 = vst [vmem:[#allocation2 + $0x1] sm:$0xff] %v342
      %351 = vst [vmem:[#allocation2 + $0x9] sm:$0xff] %v343
      %352 = vst [vmem:[#allocation2 + $0x11] sm:$0xff] %v344
      %353 = vst [vmem:[#allocation2 + $0x19] sm:$0xff] %v345
      %354 = vst [vmem:[#allocation2 + $0x21] sm:$0xff] %v346
      %355 = vst [vmem:[#allocation2 + $0x29] sm:$0xff] %v347
      %356 = vst [vmem:[#allocation2 + $0x31] sm:$0xff] %v348
      %357 = vst [vmem:[#allocation2 + $0x39] sm:$0xff] %v349
      %vm358 = vcmp.ne.s32.totalorder %v326, 0
      %vm359 = vcmp.ne.s32.totalorder %v327, 0
      %vm360 = vcmp.ne.s32.totalorder %v328, 0
      %vm361 = vcmp.ne.s32.totalorder %v329, 0
      %vm362 = vcmp.ne.s32.totalorder %v330, 0
      %vm363 = vcmp.ne.s32.totalorder %v331, 0
      %vm364 = vcmp.ne.s32.totalorder %v332, 0
      %vm365 = vcmp.ne.s32.totalorder %v333, 0
      %v366 = vld [vmem:[#allocation2] sm:$0xff]
      %v367 = vld [vmem:[#allocation2 + $0x8] sm:$0xff]
      %v368 = vld [vmem:[#allocation2 + $0x10] sm:$0xff]
      %v369 = vld [vmem:[#allocation2 + $0x18] sm:$0xff]
      %v370 = vld [vmem:[#allocation2 + $0x20] sm:$0xff]
      %v371 = vld [vmem:[#allocation2 + $0x28] sm:$0xff]
      %v372 = vld [vmem:[#allocation2 + $0x30] sm:$0xff]
      %v373 = vld [vmem:[#allocation2 + $0x38] sm:$0xff]
      %v374 = vsel %vm358, %v366, 0.0
      %v375 = vsel %vm359, %v367, 0.0
      %v376 = vsel %vm360, %v368, 0.0
      %v377 = vsel %vm361, %v369, 0.0
      %v378 = vsel %vm362, %v370, 0.0
      %v379 = vsel %vm363, %v371, 0.0
      %v380 = vsel %vm364, %v372, 0.0
      %v381 = vsel %vm365, %v373, 0.0
      %v382 = vpack.c.bf16 %v375, %v374
      %v383 = vpack.c.bf16 %v377, %v376
      %v384 = vpack.c.bf16 %v379, %v378
      %v385 = vpack.c.bf16 %v381, %v380
      %vm386 = vcmp.ne.s32.totalorder %v326, 15
      %vm387 = vcmp.ne.s32.totalorder %v327, 15
      %vm388 = vcmp.ne.s32.totalorder %v328, 15
      %vm389 = vcmp.ne.s32.totalorder %v329, 15
      %vm390 = vcmp.ne.s32.totalorder %v330, 15
      %vm391 = vcmp.ne.s32.totalorder %v331, 15
      %vm392 = vcmp.ne.s32.totalorder %v332, 15
      %vm393 = vcmp.ne.s32.totalorder %v333, 15
      %v394 = vld [vmem:[#allocation2 + $0x2] sm:$0xff]
      %v395 = vld [vmem:[#allocation2 + $0xa] sm:$0xff]
      %v396 = vld [vmem:[#allocation2 + $0x12] sm:$0xff]
      %v397 = vld [vmem:[#allocation2 + $0x1a] sm:$0xff]
      %v398 = vld [vmem:[#allocation2 + $0x22] sm:$0xff]
      %v399 = vld [vmem:[#allocation2 + $0x2a] sm:$0xff]
      %v400 = vld [vmem:[#allocation2 + $0x32] sm:$0xff]
      %v401 = vld [vmem:[#allocation2 + $0x3a] sm:$0xff]
      %v402 = vsel %vm386, %v394, 0.0
      %v403 = vsel %vm387, %v395, 0.0
      %v404 = vsel %vm388, %v396, 0.0
      %v405 = vsel %vm389, %v397, 0.0
      %v406 = vsel %vm390, %v398, 0.0
      %v407 = vsel %vm391, %v399, 0.0
      %v408 = vsel %vm392, %v400, 0.0
      %v409 = vsel %vm393, %v401, 0.0
      %v410 = vpack.c.bf16 %v403, %v402
      %v411 = vpack.c.bf16 %v405, %v404
      %v412 = vpack.c.bf16 %v407, %v406
      %v413 = vpack.c.bf16 %v409, %v408
      %v422 = vunpack.c.l.b16 %v334
      %v423 = vunpack.c.l.b16 %v335
      %v424 = vunpack.c.l.b16 %v336
      %v425 = vunpack.c.l.b16 %v337
      %v426 = vunpack.c.l.b16 %v338
      %v427 = vunpack.c.l.b16 %v339
      %v428 = vunpack.c.l.b16 %v340
      %v429 = vunpack.c.l.b16 %v341
      %v430 = vpack.c.b16 %v423, %v422
      %v431 = vpack.c.b16 %v425, %v424
      %v432 = vpack.c.b16 %v427, %v426
      %v433 = vpack.c.b16 %v429, %v428
      %v438 = vld [vmem:[%s1] sm:$0xf]
      %v439 = vld [vmem:[%s1 + $0x4] sm:$0xf]
      %v440 = vld [vmem:[%s1 + $0x8] sm:$0xf]
      %v441 = vld [vmem:[%s1 + $0xc] sm:$0xf]
      %v442 = vld [vmem:[%s1 + $0x10] sm:$0xf]
      %v443 = vld [vmem:[%s1 + $0x14] sm:$0xf]
      %v444 = vld [vmem:[%s1 + $0x18] sm:$0xf]
      %v445 = vld [vmem:[%s1 + $0x1c] sm:$0xf]
      %v446 = vld [vmem:[%s1 + $0x20] sm:$0xf]
      %v447 = vld [vmem:[%s1 + $0x24] sm:$0xf]
      %v448 = vld [vmem:[%s1 + $0x28] sm:$0xf]
      %v449 = vld [vmem:[%s1 + $0x2c] sm:$0xf]
      %v450 = vld [vmem:[%s1 + $0x30] sm:$0xf]
      %v451 = vld [vmem:[%s1 + $0x34] sm:$0xf]
      %v452 = vld [vmem:[%s1 + $0x38] sm:$0xf]
      %v453 = vld [vmem:[%s1 + $0x3c] sm:$0xf]
      %v454 = vld [vmem:[%s1 + $0x40] sm:$0xf]
      %v455 = vld [vmem:[%s1 + $0x44] sm:$0xf]
      %v456 = vld [vmem:[%s1 + $0x48] sm:$0xf]
      %v457 = vld [vmem:[%s1 + $0x4c] sm:$0xf]
      %v458 = vld [vmem:[%s1 + $0x50] sm:$0xf]
      %v459 = vld [vmem:[%s1 + $0x54] sm:$0xf]
      %v460 = vld [vmem:[%s1 + $0x58] sm:$0xf]
      %v461 = vld [vmem:[%s1 + $0x5c] sm:$0xf]
      %v462 = vld [vmem:[%s1 + $0x60] sm:$0xf]
      %v463 = vld [vmem:[%s1 + $0x64] sm:$0xf]
      %v464 = vld [vmem:[%s1 + $0x68] sm:$0xf]
      %v465 = vld [vmem:[%s1 + $0x6c] sm:$0xf]
      %v466 = vld [vmem:[%s1 + $0x70] sm:$0xf]
      %v467 = vld [vmem:[%s1 + $0x74] sm:$0xf]
      %v468 = vld [vmem:[%s1 + $0x78] sm:$0xf]
      %v469 = vld [vmem:[%s1 + $0x7c] sm:$0xf]
      %v470 = vld [vmem:[%s1 + $0x80] sm:$0xf]
      %v471 = vld [vmem:[%s1 + $0x84] sm:$0xf]
      %v472 = vld [vmem:[%s1 + $0x88] sm:$0xf]
      %v473 = vld [vmem:[%s1 + $0x8c] sm:$0xf]
      %v474 = vld [vmem:[%s1 + $0x90] sm:$0xf]
      %v475 = vld [vmem:[%s1 + $0x94] sm:$0xf]
      %v476 = vld [vmem:[%s1 + $0x98] sm:$0xf]
      %v477 = vld [vmem:[%s1 + $0x9c] sm:$0xf]
      %v478 = vld [vmem:[%s1 + $0xa0] sm:$0xf]
      %v479 = vld [vmem:[%s1 + $0xa4] sm:$0xf]
      %v480 = vld [vmem:[%s1 + $0xa8] sm:$0xf]
      %v481 = vld [vmem:[%s1 + $0xac] sm:$0xf]
      %v482 = vld [vmem:[%s1 + $0xb0] sm:$0xf]
      %v483 = vld [vmem:[%s1 + $0xb4] sm:$0xf]
      %v484 = vld [vmem:[%s1 + $0xb8] sm:$0xf]
      %v485 = vld [vmem:[%s1 + $0xbc] sm:$0xf]
      %v486 = vld [vmem:[%s2] sm:$0x1]
      %v488 = vlaneseq
      %v489 = vshrl.u32 %v488, 7
      %v490 = vsub.s32 0, %v489
      %v491 = vrot.slane %v486, %v490
      %v541 = vunpack.c.l.b16 %v438
      %v542 = vunpack.c.l.b16 %v439
      %v543 = vunpack.c.l.b16 %v440
      %v544 = vunpack.c.l.b16 %v441
      %v545 = vunpack.c.l.b16 %v442
      %v546 = vunpack.c.l.b16 %v443
      %v547 = vunpack.c.l.b16 %v444
      %v548 = vunpack.c.l.b16 %v445
      %v549 = vunpack.c.l.b16 %v446
      %v550 = vunpack.c.l.b16 %v447
      %v551 = vunpack.c.l.b16 %v448
      %v552 = vunpack.c.l.b16 %v449
      %v553 = vunpack.c.l.b16 %v450
      %v554 = vunpack.c.l.b16 %v451
      %v555 = vunpack.c.l.b16 %v452
      %v556 = vunpack.c.l.b16 %v453
      %v557 = vunpack.c.l.b16 %v454
      %v558 = vunpack.c.l.b16 %v455
      %v559 = vunpack.c.l.b16 %v456
      %v560 = vunpack.c.l.b16 %v457
      %v561 = vunpack.c.l.b16 %v458
      %v562 = vunpack.c.l.b16 %v459
      %v563 = vunpack.c.l.b16 %v460
      %v564 = vunpack.c.l.b16 %v461
      %v565 = vunpack.c.l.b16 %v462
      %v566 = vunpack.c.l.b16 %v463
      %v567 = vunpack.c.l.b16 %v464
      %v568 = vunpack.c.l.b16 %v465
      %v569 = vunpack.c.l.b16 %v466
      %v570 = vunpack.c.l.b16 %v467
      %v571 = vunpack.c.l.b16 %v468
      %v572 = vunpack.c.l.b16 %v469
      %v573 = vunpack.c.l.b16 %v470
      %v574 = vunpack.c.l.b16 %v471
      %v575 = vunpack.c.l.b16 %v472
      %v576 = vunpack.c.l.b16 %v473
      %v577 = vunpack.c.l.b16 %v474
      %v578 = vunpack.c.l.b16 %v475
      %v579 = vunpack.c.l.b16 %v476
      %v580 = vunpack.c.l.b16 %v477
      %v581 = vunpack.c.l.b16 %v478
      %v582 = vunpack.c.l.b16 %v479
      %v583 = vunpack.c.l.b16 %v480
      %v584 = vunpack.c.l.b16 %v481
      %v585 = vunpack.c.l.b16 %v482
      %v586 = vunpack.c.l.b16 %v483
      %v587 = vunpack.c.l.b16 %v484
      %v588 = vunpack.c.l.b16 %v485
      %v589 = vpack.c.b16 %v542, %v541
      %v590 = vpack.c.b16 %v544, %v543
      %v591 = vpack.c.b16 %v546, %v545
      %v592 = vpack.c.b16 %v548, %v547
      %v593 = vpack.c.b16 %v550, %v549
      %v594 = vpack.c.b16 %v552, %v551
      %v595 = vpack.c.b16 %v554, %v553
      %v596 = vpack.c.b16 %v556, %v555
      %v597 = vpack.c.b16 %v558, %v557
      %v598 = vpack.c.b16 %v560, %v559
      %v599 = vpack.c.b16 %v562, %v561
      %v600 = vpack.c.b16 %v564, %v563
      %v601 = vpack.c.b16 %v566, %v565
      %v602 = vpack.c.b16 %v568, %v567
      %v603 = vpack.c.b16 %v570, %v569
      %v604 = vpack.c.b16 %v572, %v571
      %v605 = vpack.c.b16 %v574, %v573
      %v606 = vpack.c.b16 %v576, %v575
      %v607 = vpack.c.b16 %v578, %v577
      %v608 = vpack.c.b16 %v580, %v579
      %v609 = vpack.c.b16 %v582, %v581
      %v610 = vpack.c.b16 %v584, %v583
      %v611 = vpack.c.b16 %v586, %v585
      %v612 = vpack.c.b16 %v588, %v587
      %637 = vmatprep.subr.bf16.mxu0 0
      %638 = vmatpush1.bf16.msra.mxu0 %v596
      %639 = vmatprep.subr.bf16.mxu0 0
      %640 = vmatpush1.bf16.msra.mxu0 %v595
      %641 = vmatprep.subr.bf16.mxu0 0
      %642 = vmatpush1.bf16.msra.mxu0 %v594
      %643 = vmatprep.subr.bf16.mxu0 0
      %644 = vmatpush1.bf16.msra.mxu0 %v593
      %645 = vmatprep.subr.bf16.mxu0 0
      %646 = vmatpush1.bf16.msra.mxu0 %v592
      %647 = vmatprep.subr.bf16.mxu0 0
      %648 = vmatpush1.bf16.msra.mxu0 %v591
      %649 = vmatprep.subr.bf16.mxu0 0
      %650 = vmatpush1.bf16.msra.mxu0 %v590
      %651 = vmatprep.subr.bf16.mxu0 0
      %652 = vmatpush1.bf16.msra.mxu0 %v589
      %653 = vmatprep.subr.bf16.mxu0 0
      %654 = vmatpush2.bf16.msra.mxu0 %v604
      %655 = vmatprep.subr.bf16.mxu0 0
      %656 = vmatpush2.bf16.msra.mxu0 %v603
      %657 = vmatprep.subr.bf16.mxu0 0
      %658 = vmatpush2.bf16.msra.mxu0 %v602
      %659 = vmatprep.subr.bf16.mxu0 0
      %660 = vmatpush2.bf16.msra.mxu0 %v601
      %661 = vmatprep.subr.bf16.mxu0 0
      %662 = vmatpush2.bf16.msra.mxu0 %v600
      %663 = vmatprep.subr.bf16.mxu0 0
      %664 = vmatpush2.bf16.msra.mxu0 %v599
      %665 = vmatprep.subr.bf16.mxu0 0
      %666 = vmatpush2.bf16.msra.mxu0 %v598
      %667 = vmatprep.subr.bf16.mxu0 0
      %668 = vmatpush2.bf16.msra.mxu0 %v597
      %669 = vmatprep.mubr.bf16.mxu0 %v430
      %670 = vmatmul.mubr.bf16.gmra.mxu0 %v382
      %v671 = vpop.f32.mrf.mxu0
      %v672 = vadd.f32 %v491, %v671
      %v673 = vpop.f32.mrf.mxu0
      %v674 = vpop.f32.mrf.mxu0
      %v675 = vadd.f32 %v491, %v674
      %v676 = vpop.f32.mrf.mxu0
      %677 = vmatprep.mubr.bf16.mxu0 %v431
      %678 = vmatmul.mubr.bf16.gmra.mxu0 %v383
      %v679 = vpop.f32.mrf.mxu0
      %v680 = vadd.f32 %v491, %v679
      %v681 = vpop.f32.mrf.mxu0
      %v682 = vpop.f32.mrf.mxu0
      %v683 = vadd.f32 %v491, %v682
      %v684 = vpop.f32.mrf.mxu0
      %685 = vmatprep.mubr.bf16.mxu0 %v432
      %686 = vmatmul.mubr.bf16.gmra.mxu0 %v384
      %v687 = vpop.f32.mrf.mxu0
      %v688 = vadd.f32 %v491, %v687
      %v689 = vpop.f32.mrf.mxu0
      %v690 = vpop.f32.mrf.mxu0
      %v691 = vadd.f32 %v491, %v690
      %v692 = vpop.f32.mrf.mxu0
      %693 = vmatprep.mubr.bf16.mxu0 %v433
      %694 = vmatmul.mubr.bf16.gmra.mxu0 %v385
      %v695 = vpop.f32.mrf.mxu0
      %v696 = vadd.f32 %v491, %v695
      %v697 = vpop.f32.mrf.mxu0
      %v698 = vpop.f32.mrf.mxu0
      %v699 = vadd.f32 %v491, %v698
      %v700 = vpop.f32.mrf.mxu0
      %701 = vdwg.mxu0
      %702 = vmatprep.subr.bf16.mxu0 0
      %703 = vmatpush1.bf16.msra.mxu0 %v612
      %704 = vmatprep.subr.bf16.mxu0 0
      %705 = vmatpush1.bf16.msra.mxu0 %v611
      %706 = vmatprep.subr.bf16.mxu0 0
      %707 = vmatpush1.bf16.msra.mxu0 %v610
      %708 = vmatprep.subr.bf16.mxu0 0
      %709 = vmatpush1.bf16.msra.mxu0 %v609
      %710 = vmatprep.subr.bf16.mxu0 0
      %711 = vmatpush1.bf16.msra.mxu0 %v608
      %712 = vmatprep.subr.bf16.mxu0 0
      %713 = vmatpush1.bf16.msra.mxu0 %v607
      %714 = vmatprep.subr.bf16.mxu0 0
      %715 = vmatpush1.bf16.msra.mxu0 %v606
      %716 = vmatprep.subr.bf16.mxu0 0
      %717 = vmatpush1.bf16.msra.mxu0 %v605
      %718 = vmatprep.subr.bf16.mxu0 0
      %719 = vmatpush2.bf16.msra.mxu0 0
      %720 = vmatprep.subr.bf16.mxu0 0
      %721 = vmatpush2.bf16.msra.mxu0 0
      %722 = vmatprep.subr.bf16.mxu0 0
      %723 = vmatpush2.bf16.msra.mxu0 0
      %724 = vmatprep.subr.bf16.mxu0 0
      %725 = vmatpush2.bf16.msra.mxu0 0
      %726 = vmatprep.subr.bf16.mxu0 0
      %727 = vmatpush2.bf16.msra.mxu0 0
      %728 = vmatprep.subr.bf16.mxu0 0
      %729 = vmatpush2.bf16.msra.mxu0 0
      %730 = vmatprep.subr.bf16.mxu0 0
      %731 = vmatpush2.bf16.msra.mxu0 0
      %732 = vmatprep.subr.bf16.mxu0 0
      %733 = vmatpush2.bf16.msra.mxu0 0
      %734 = vmatprep.mubr.bf16.mxu0 0
      %735 = vmatmul.mubr.bf16.gmra.mxu0 %v410
      %v736 = vpop.f32.mrf.mxu0
      %v737 = vadd.f32 %v672, %v736
      %v738 = vpop.f32.mrf.mxu0
      %v739 = vpop.f32.mrf.mxu0
      %v740 = vadd.f32 %v675, %v739
      %v741 = vpop.f32.mrf.mxu0
      %742 = vmatprep.mubr.bf16.mxu0 0
      %743 = vmatmul.mubr.bf16.gmra.mxu0 %v411
      %v744 = vpop.f32.mrf.mxu0
      %v745 = vadd.f32 %v680, %v744
      %v746 = vpop.f32.mrf.mxu0
      %v747 = vpop.f32.mrf.mxu0
      %v748 = vadd.f32 %v683, %v747
      %v749 = vpop.f32.mrf.mxu0
      %750 = vmatprep.mubr.bf16.mxu0 0
      %751 = vmatmul.mubr.bf16.gmra.mxu0 %v412
      %v752 = vpop.f32.mrf.mxu0
      %v753 = vadd.f32 %v688, %v752
      %v754 = vpop.f32.mrf.mxu0
      %v755 = vpop.f32.mrf.mxu0
      %v756 = vadd.f32 %v691, %v755
      %v757 = vpop.f32.mrf.mxu0
      %758 = vmatprep.mubr.bf16.mxu0 0
      %759 = vmatmul.mubr.bf16.gmra.mxu0 %v413
      %v760 = vpop.f32.mrf.mxu0
      %v761 = vadd.f32 %v696, %v760
      %v762 = vpop.f32.mrf.mxu0
      %v763 = vpop.f32.mrf.mxu0
      %v764 = vadd.f32 %v699, %v763
      %v765 = vpop.f32.mrf.mxu0
      %766 = vdwg.mxu0
      %767 = vst [vmem:[#allocation3 + $0x1] sm:$0xff] %v737
      %768 = vst [vmem:[#allocation3 + $0x9] sm:$0xff] %v740
      %769 = vst [vmem:[#allocation3 + $0x11] sm:$0xff] %v745
      %770 = vst [vmem:[#allocation3 + $0x19] sm:$0xff] %v748
      %771 = vst [vmem:[#allocation3 + $0x21] sm:$0xff] %v753
      %772 = vst [vmem:[#allocation3 + $0x29] sm:$0xff] %v756
      %773 = vst [vmem:[#allocation3 + $0x31] sm:$0xff] %v761
      %774 = vst [vmem:[#allocation3 + $0x39] sm:$0xff] %v764
      %v775 = vpack.c.bf16 %v740, %v737
      %v776 = vpack.c.bf16 %v748, %v745
      %v777 = vpack.c.bf16 %v756, %v753
      %v778 = vpack.c.bf16 %v764, %v761
      %v779 = vld [vmem:[#allocation3] sm:$0xff]
      %v780 = vld [vmem:[#allocation3 + $0x8] sm:$0xff]
      %v781 = vld [vmem:[#allocation3 + $0x10] sm:$0xff]
      %v782 = vld [vmem:[#allocation3 + $0x18] sm:$0xff]
      %v783 = vld [vmem:[#allocation3 + $0x20] sm:$0xff]
      %v784 = vld [vmem:[#allocation3 + $0x28] sm:$0xff]
      %v785 = vld [vmem:[#allocation3 + $0x30] sm:$0xff]
      %v786 = vld [vmem:[#allocation3 + $0x38] sm:$0xff]
      %v787 = vsel %vm358, %v779, 0.0
      %v788 = vsel %vm359, %v780, 0.0
      %v789 = vsel %vm360, %v781, 0.0
      %v790 = vsel %vm361, %v782, 0.0
      %v791 = vsel %vm362, %v783, 0.0
      %v792 = vsel %vm363, %v784, 0.0
      %v793 = vsel %vm364, %v785, 0.0
      %v794 = vsel %vm365, %v786, 0.0
      %v795 = vpack.c.bf16 %v788, %v787
      %v796 = vpack.c.bf16 %v790, %v789
      %v797 = vpack.c.bf16 %v792, %v791
      %v798 = vpack.c.bf16 %v794, %v793
      %v799 = vld [vmem:[#allocation3 + $0x2] sm:$0xff]
      %v800 = vld [vmem:[#allocation3 + $0xa] sm:$0xff]
      %v801 = vld [vmem:[#allocation3 + $0x12] sm:$0xff]
      %v802 = vld [vmem:[#allocation3 + $0x1a] sm:$0xff]
      %v803 = vld [vmem:[#allocation3 + $0x22] sm:$0xff]
      %v804 = vld [vmem:[#allocation3 + $0x2a] sm:$0xff]
      %v805 = vld [vmem:[#allocation3 + $0x32] sm:$0xff]
      %v806 = vld [vmem:[#allocation3 + $0x3a] sm:$0xff]
      %v807 = vsel %vm386, %v799, 0.0
      %v808 = vsel %vm387, %v800, 0.0
      %v809 = vsel %vm388, %v801, 0.0
      %v810 = vsel %vm389, %v802, 0.0
      %v811 = vsel %vm390, %v803, 0.0
      %v812 = vsel %vm391, %v804, 0.0
      %v813 = vsel %vm392, %v805, 0.0
      %v814 = vsel %vm393, %v806, 0.0
      %v815 = vpack.c.bf16 %v808, %v807
      %v816 = vpack.c.bf16 %v810, %v809
      %v817 = vpack.c.bf16 %v812, %v811
      %v818 = vpack.c.bf16 %v814, %v813
      %v819 = vld [vmem:[%s3] sm:$0xf]
      %v820 = vld [vmem:[%s3 + $0x4] sm:$0xf]
      %v821 = vld [vmem:[%s3 + $0x8] sm:$0xf]
      %v822 = vld [vmem:[%s3 + $0xc] sm:$0xf]
      %v823 = vld [vmem:[%s3 + $0x10] sm:$0xf]
      %v824 = vld [vmem:[%s3 + $0x14] sm:$0xf]
      %v825 = vld [vmem:[%s3 + $0x18] sm:$0xf]
      %v826 = vld [vmem:[%s3 + $0x1c] sm:$0xf]
      %v827 = vld [vmem:[%s3 + $0x20] sm:$0xf]
      %v828 = vld [vmem:[%s3 + $0x24] sm:$0xf]
      %v829 = vld [vmem:[%s3 + $0x28] sm:$0xf]
      %v830 = vld [vmem:[%s3 + $0x2c] sm:$0xf]
      %v831 = vld [vmem:[%s3 + $0x30] sm:$0xf]
      %v832 = vld [vmem:[%s3 + $0x34] sm:$0xf]
      %v833 = vld [vmem:[%s3 + $0x38] sm:$0xf]
      %v834 = vld [vmem:[%s3 + $0x3c] sm:$0xf]
      %v835 = vld [vmem:[%s3 + $0x40] sm:$0xf]
      %v836 = vld [vmem:[%s3 + $0x44] sm:$0xf]
      %v837 = vld [vmem:[%s3 + $0x48] sm:$0xf]
      %v838 = vld [vmem:[%s3 + $0x4c] sm:$0xf]
      %v839 = vld [vmem:[%s3 + $0x50] sm:$0xf]
      %v840 = vld [vmem:[%s3 + $0x54] sm:$0xf]
      %v841 = vld [vmem:[%s3 + $0x58] sm:$0xf]
      %v842 = vld [vmem:[%s3 + $0x5c] sm:$0xf]
      %v843 = vld [vmem:[%s3 + $0x60] sm:$0xf]
      %v844 = vld [vmem:[%s3 + $0x64] sm:$0xf]
      %v845 = vld [vmem:[%s3 + $0x68] sm:$0xf]
      %v846 = vld [vmem:[%s3 + $0x6c] sm:$0xf]
      %v847 = vld [vmem:[%s3 + $0x70] sm:$0xf]
      %v848 = vld [vmem:[%s3 + $0x74] sm:$0xf]
      %v849 = vld [vmem:[%s3 + $0x78] sm:$0xf]
      %v850 = vld [vmem:[%s3 + $0x7c] sm:$0xf]
      %v851 = vld [vmem:[%s3 + $0x80] sm:$0xf]
      %v852 = vld [vmem:[%s3 + $0x84] sm:$0xf]
      %v853 = vld [vmem:[%s3 + $0x88] sm:$0xf]
      %v854 = vld [vmem:[%s3 + $0x8c] sm:$0xf]
      %v855 = vld [vmem:[%s3 + $0x90] sm:$0xf]
      %v856 = vld [vmem:[%s3 + $0x94] sm:$0xf]
      %v857 = vld [vmem:[%s3 + $0x98] sm:$0xf]
      %v858 = vld [vmem:[%s3 + $0x9c] sm:$0xf]
      %v859 = vld [vmem:[%s3 + $0xa0] sm:$0xf]
      %v860 = vld [vmem:[%s3 + $0xa4] sm:$0xf]
      %v861 = vld [vmem:[%s3 + $0xa8] sm:$0xf]
      %v862 = vld [vmem:[%s3 + $0xac] sm:$0xf]
      %v863 = vld [vmem:[%s3 + $0xb0] sm:$0xf]
      %v864 = vld [vmem:[%s3 + $0xb4] sm:$0xf]
      %v865 = vld [vmem:[%s3 + $0xb8] sm:$0xf]
      %v866 = vld [vmem:[%s3 + $0xbc] sm:$0xf]
      %v867 = vld [vmem:[%s4] sm:$0x1]
      %v869 = vlaneseq
      %v870 = vshrl.u32 %v869, 7
      %v871 = vsub.s32 0, %v870
      %v872 = vrot.slane %v867, %v871
      %v922 = vunpack.c.l.b16 %v819
      %v923 = vunpack.c.l.b16 %v820
      %v924 = vunpack.c.l.b16 %v821
      %v925 = vunpack.c.l.b16 %v822
      %v926 = vunpack.c.l.b16 %v823
      %v927 = vunpack.c.l.b16 %v824
      %v928 = vunpack.c.l.b16 %v825
      %v929 = vunpack.c.l.b16 %v826
      %v930 = vunpack.c.l.b16 %v827
      %v931 = vunpack.c.l.b16 %v828
      %v932 = vunpack.c.l.b16 %v829
      %v933 = vunpack.c.l.b16 %v830
      %v934 = vunpack.c.l.b16 %v831
      %v935 = vunpack.c.l.b16 %v832
      %v936 = vunpack.c.l.b16 %v833
      %v937 = vunpack.c.l.b16 %v834
      %v938 = vunpack.c.l.b16 %v835
      %v939 = vunpack.c.l.b16 %v836
      %v940 = vunpack.c.l.b16 %v837
      %v941 = vunpack.c.l.b16 %v838
      %v942 = vunpack.c.l.b16 %v839
      %v943 = vunpack.c.l.b16 %v840
      %v944 = vunpack.c.l.b16 %v841
      %v945 = vunpack.c.l.b16 %v842
      %v946 = vunpack.c.l.b16 %v843
      %v947 = vunpack.c.l.b16 %v844
      %v948 = vunpack.c.l.b16 %v845
      %v949 = vunpack.c.l.b16 %v846
      %v950 = vunpack.c.l.b16 %v847
      %v951 = vunpack.c.l.b16 %v848
      %v952 = vunpack.c.l.b16 %v849
      %v953 = vunpack.c.l.b16 %v850
      %v954 = vunpack.c.l.b16 %v851
      %v955 = vunpack.c.l.b16 %v852
      %v956 = vunpack.c.l.b16 %v853
      %v957 = vunpack.c.l.b16 %v854
      %v958 = vunpack.c.l.b16 %v855
      %v959 = vunpack.c.l.b16 %v856
      %v960 = vunpack.c.l.b16 %v857
      %v961 = vunpack.c.l.b16 %v858
      %v962 = vunpack.c.l.b16 %v859
      %v963 = vunpack.c.l.b16 %v860
      %v964 = vunpack.c.l.b16 %v861
      %v965 = vunpack.c.l.b16 %v862
      %v966 = vunpack.c.l.b16 %v863
      %v967 = vunpack.c.l.b16 %v864
      %v968 = vunpack.c.l.b16 %v865
      %v969 = vunpack.c.l.b16 %v866
      %v970 = vpack.c.b16 %v923, %v922
      %v971 = vpack.c.b16 %v925, %v924
      %v972 = vpack.c.b16 %v927, %v926
      %v973 = vpack.c.b16 %v929, %v928
      %v974 = vpack.c.b16 %v931, %v930
      %v975 = vpack.c.b16 %v933, %v932
      %v976 = vpack.c.b16 %v935, %v934
      %v977 = vpack.c.b16 %v937, %v936
      %v978 = vpack.c.b16 %v939, %v938
      %v979 = vpack.c.b16 %v941, %v940
      %v980 = vpack.c.b16 %v943, %v942
      %v981 = vpack.c.b16 %v945, %v944
      %v982 = vpack.c.b16 %v947, %v946
      %v983 = vpack.c.b16 %v949, %v948
      %v984 = vpack.c.b16 %v951, %v950
      %v985 = vpack.c.b16 %v953, %v952
      %v986 = vpack.c.b16 %v955, %v954
      %v987 = vpack.c.b16 %v957, %v956
      %v988 = vpack.c.b16 %v959, %v958
      %v989 = vpack.c.b16 %v961, %v960
      %v990 = vpack.c.b16 %v963, %v962
      %v991 = vpack.c.b16 %v965, %v964
      %v992 = vpack.c.b16 %v967, %v966
      %v993 = vpack.c.b16 %v969, %v968
      %1018 = vmatprep.subr.bf16.mxu0 0
      %1019 = vmatpush1.bf16.msra.mxu0 %v977
      %1020 = vmatprep.subr.bf16.mxu0 0
      %1021 = vmatpush1.bf16.msra.mxu0 %v976
      %1022 = vmatprep.subr.bf16.mxu0 0
      %1023 = vmatpush1.bf16.msra.mxu0 %v975
      %1024 = vmatprep.subr.bf16.mxu0 0
      %1025 = vmatpush1.bf16.msra.mxu0 %v974
      %1026 = vmatprep.subr.bf16.mxu0 0
      %1027 = vmatpush1.bf16.msra.mxu0 %v973
      %1028 = vmatprep.subr.bf16.mxu0 0
      %1029 = vmatpush1.bf16.msra.mxu0 %v972
      %1030 = vmatprep.subr.bf16.mxu0 0
      %1031 = vmatpush1.bf16.msra.mxu0 %v971
      %1032 = vmatprep.subr.bf16.mxu0 0
      %1033 = vmatpush1.bf16.msra.mxu0 %v970
      %1034 = vmatprep.subr.bf16.mxu0 0
      %1035 = vmatpush2.bf16.msra.mxu0 %v985
      %1036 = vmatprep.subr.bf16.mxu0 0
      %1037 = vmatpush2.bf16.msra.mxu0 %v984
      %1038 = vmatprep.subr.bf16.mxu0 0
      %1039 = vmatpush2.bf16.msra.mxu0 %v983
      %1040 = vmatprep.subr.bf16.mxu0 0
      %1041 = vmatpush2.bf16.msra.mxu0 %v982
      %1042 = vmatprep.subr.bf16.mxu0 0
      %1043 = vmatpush2.bf16.msra.mxu0 %v981
      %1044 = vmatprep.subr.bf16.mxu0 0
      %1045 = vmatpush2.bf16.msra.mxu0 %v980
      %1046 = vmatprep.subr.bf16.mxu0 0
      %1047 = vmatpush2.bf16.msra.mxu0 %v979
      %1048 = vmatprep.subr.bf16.mxu0 0
      %1049 = vmatpush2.bf16.msra.mxu0 %v978
      %1050 = vmatprep.mubr.bf16.mxu0 %v775
      %1051 = vmatmul.mubr.bf16.gmra.mxu0 %v795
      %v1052 = vpop.f32.mrf.mxu0
      %v1053 = vadd.f32 %v872, %v1052
      %v1054 = vpop.f32.mrf.mxu0
      %v1055 = vpop.f32.mrf.mxu0
      %v1056 = vadd.f32 %v872, %v1055
      %v1057 = vpop.f32.mrf.mxu0
      %1058 = vmatprep.mubr.bf16.mxu0 %v776
      %1059 = vmatmul.mubr.bf16.gmra.mxu0 %v796
      %v1060 = vpop.f32.mrf.mxu0
      %v1061 = vadd.f32 %v872, %v1060
      %v1062 = vpop.f32.mrf.mxu0
      %v1063 = vpop.f32.mrf.mxu0
      %v1064 = vadd.f32 %v872, %v1063
      %v1065 = vpop.f32.mrf.mxu0
      %1066 = vmatprep.mubr.bf16.mxu0 %v777
      %1067 = vmatmul.mubr.bf16.gmra.mxu0 %v797
      %v1068 = vpop.f32.mrf.mxu0
      %v1069 = vadd.f32 %v872, %v1068
      %v1070 = vpop.f32.mrf.mxu0
      %v1071 = vpop.f32.mrf.mxu0
      %v1072 = vadd.f32 %v872, %v1071
      %v1073 = vpop.f32.mrf.mxu0
      %1074 = vmatprep.mubr.bf16.mxu0 %v778
      %1075 = vmatmul.mubr.bf16.gmra.mxu0 %v798
      %v1076 = vpop.f32.mrf.mxu0
      %v1077 = vadd.f32 %v872, %v1076
      %v1078 = vpop.f32.mrf.mxu0
      %v1079 = vpop.f32.mrf.mxu0
      %v1080 = vadd.f32 %v872, %v1079
      %v1081 = vpop.f32.mrf.mxu0
      %1082 = vdwg.mxu0
      %1083 = vmatprep.subr.bf16.mxu0 0
      %1084 = vmatpush1.bf16.msra.mxu0 %v993
      %1085 = vmatprep.subr.bf16.mxu0 0
      %1086 = vmatpush1.bf16.msra.mxu0 %v992
      %1087 = vmatprep.subr.bf16.mxu0 0
      %1088 = vmatpush1.bf16.msra.mxu0 %v991
      %1089 = vmatprep.subr.bf16.mxu0 0
      %1090 = vmatpush1.bf16.msra.mxu0 %v990
      %1091 = vmatprep.subr.bf16.mxu0 0
      %1092 = vmatpush1.bf16.msra.mxu0 %v989
      %1093 = vmatprep.subr.bf16.mxu0 0
      %1094 = vmatpush1.bf16.msra.mxu0 %v988
      %1095 = vmatprep.subr.bf16.mxu0 0
      %1096 = vmatpush1.bf16.msra.mxu0 %v987
      %1097 = vmatprep.subr.bf16.mxu0 0
      %1098 = vmatpush1.bf16.msra.mxu0 %v986
      %1099 = vmatprep.subr.bf16.mxu0 0
      %1100 = vmatpush2.bf16.msra.mxu0 0
      %1101 = vmatprep.subr.bf16.mxu0 0
      %1102 = vmatpush2.bf16.msra.mxu0 0
      %1103 = vmatprep.subr.bf16.mxu0 0
      %1104 = vmatpush2.bf16.msra.mxu0 0
      %1105 = vmatprep.subr.bf16.mxu0 0
      %1106 = vmatpush2.bf16.msra.mxu0 0
      %1107 = vmatprep.subr.bf16.mxu0 0
      %1108 = vmatpush2.bf16.msra.mxu0 0
      %1109 = vmatprep.subr.bf16.mxu0 0
      %1110 = vmatpush2.bf16.msra.mxu0 0
      %1111 = vmatprep.subr.bf16.mxu0 0
      %1112 = vmatpush2.bf16.msra.mxu0 0
      %1113 = vmatprep.subr.bf16.mxu0 0
      %1114 = vmatpush2.bf16.msra.mxu0 0
      %1115 = vmatprep.mubr.bf16.mxu0 0
      %1116 = vmatmul.mubr.bf16.gmra.mxu0 %v815
      %v1117 = vpop.f32.mrf.mxu0
      %v1118 = vadd.f32 %v1053, %v1117
      %v1119 = vpop.f32.mrf.mxu0
      %v1120 = vpop.f32.mrf.mxu0
      %v1121 = vadd.f32 %v1056, %v1120
      %v1122 = vpop.f32.mrf.mxu0
      %1123 = vmatprep.mubr.bf16.mxu0 0
      %1124 = vmatmul.mubr.bf16.gmra.mxu0 %v816
      %v1125 = vpop.f32.mrf.mxu0
      %v1126 = vadd.f32 %v1061, %v1125
      %v1127 = vpop.f32.mrf.mxu0
      %v1128 = vpop.f32.mrf.mxu0
      %v1129 = vadd.f32 %v1064, %v1128
      %v1130 = vpop.f32.mrf.mxu0
      %1131 = vmatprep.mubr.bf16.mxu0 0
      %1132 = vmatmul.mubr.bf16.gmra.mxu0 %v817
      %v1133 = vpop.f32.mrf.mxu0
      %v1134 = vadd.f32 %v1069, %v1133
      %v1135 = vpop.f32.mrf.mxu0
      %v1136 = vpop.f32.mrf.mxu0
      %v1137 = vadd.f32 %v1072, %v1136
      %v1138 = vpop.f32.mrf.mxu0
      %1139 = vmatprep.mubr.bf16.mxu0 0
      %1140 = vmatmul.mubr.bf16.gmra.mxu0 %v818
      %v1141 = vpop.f32.mrf.mxu0
      %v1142 = vadd.f32 %v1077, %v1141
      %v1143 = vpop.f32.mrf.mxu0
      %v1144 = vpop.f32.mrf.mxu0
      %v1145 = vadd.f32 %v1080, %v1144
      %v1146 = vpop.f32.mrf.mxu0
      %1147 = vdwg.mxu0
      %1148 = vst [vmem:[%s226] sm:$0xff] %v1118
      %1149 = vst [vmem:[%s226 + $0x8] sm:$0xff] %v1121
      %1150 = vst [vmem:[%s226 + $0x10] sm:$0xff] %v1126
      %1151 = vst [vmem:[%s226 + $0x18] sm:$0xff] %v1129
      %1152 = vst [vmem:[%s226 + $0x20] sm:$0xff] %v1134
      %1153 = vst [vmem:[%s226 + $0x28] sm:$0xff] %v1137
      %1154 = vst [vmem:[%s226 + $0x30] sm:$0xff] %v1142
      %1155 = vst [vmem:[%s226 + $0x38] sm:$0xff] %v1145
      %s1156 = smul.u32 8, %s16
      %p1157 = scmp.lt.s32.totalorder %s1156, 15
      %s1158 = scalar_select %p1157, %s1156, 15
      %s1159 = smul.addr %s1158, 8
      %s1160 = scalar_lea.vmem %s5, %s1159
      // Predicated region
      $region41: #{embedding_block_forward.1} parent=39 // pred_check
        %p1161 = pneg %p144
      $region42: #{embedding_block_forward.1} parent=39 // pred_check_branch
        %1163 = sbr.rel (%p1161) target = $region44
      $region43: #{embedding_block_forward.1} parent=39 // pred_region
        %s1164 = smul.u32 8, %s16
      $region44: #{embedding_block_forward.1} parent=39 // pred_fallthru
        _
    $region40: #{embedding_block_forward.1} parent=5 // pred_fallthru
      _
    %p1165 = scmp.le.s32.totalorder 2, %s11
    // Predicated region
    $region45: #{embedding_block_forward.1} parent=5 // pred_check
      %p1166 = pneg %p1165
    $region46: #{embedding_block_forward.1} parent=5 // pred_check_branch
      %1168 = sbr.rel (%p1166) target = $region48
    $region47: #{embedding_block_forward.1} parent=5 // pred_region
      %s1169 = ssub.s32 %s11, 2
      // Predicated region
      $region49: #{embedding_block_forward.1} parent=47 // pred_check
        %p1170 = pneg %p150
      $region50: #{embedding_block_forward.1} parent=47 // pred_check_branch
        %1172 = sbr.rel (%p1170) target = $region52
      $region51: #{embedding_block_forward.1} parent=47 // pred_region
        %s1173 = smul.u32 8, %s17
        %p1174 = scmp.lt.s32.totalorder %s1173, 15
        %s1175 = scalar_select %p1174, %s1173, 15
        %s1176 = smul.addr %s1175, 8
        %s1177 = scalar_lea.vmem %s5, %s1176
      $region52: #{embedding_block_forward.1} parent=47 // pred_fallthru
        _
    $region48: #{embedding_block_forward.1} parent=5 // pred_fallthru
      _
  $region6: #{embedding_block_forward.1} parent=0 // loop_footer
    %s15 = sadd.s32 1, %s11
  $region7: #{embedding_block_forward.1} parent=0 // loop_footer_branch
    %10 = sbr.rel target = $region3
  $region8: #{embedding_block_forward.1} parent=0 // loop_exit
    _

</llo_original>
